<compile_context>
chip_gen: v7x
topology: tpu7x:2x2x1
jax: 0.10.0
libtpu: 0.0.40
codegen_flags: <defaults>
</compile_context>

<pallas_src>
import math
import numpy as np
import jax
import jax.numpy as jnp
from jax.experimental import pallas as pl
from jax.experimental.pallas import tpu as pltpu

_EPS = 1e-5        # matches F.normalize(eps=1e-05)
_LANES = 128
HID = 64           # logical hidden width of the resmodel stand-in head

# packed-input row layout (single (8, 128) f32 array)
_ROW_POS, _ROW_BG, _ROW_B1, _ROW_B2 = 0, 1, 2, 3
_ROW_W1R0, _ROW_W1R1, _ROW_W1R2, _ROW_W2 = 4, 5, 6, 7
# packed-output lane layout (single (1, 128) f32 row)
_LANE_PRED, _LANE_LOSS, _LANE_RT0 = 0, 1, 2          # Rt occupies lanes 2..17


# ----------------------------------------------------------------------------
# Fused kernel: look_at_rotation + T (view matrix)  +  stand-in head  +  MSE
# ----------------------------------------------------------------------------
def _merf_fused_kernel(packed_ref, out_ref):
    packed = packed_ref[...]                                   # (8, 128), 1 vreg
    lane = jax.lax.broadcasted_iota(jnp.int32, (1, _LANES), 1)

    def e(k):                                                  # lane one-hot
        return (lane == k).astype(jnp.float32)

    # ---------------- camera: look_at_rotation + translation ----------------
    pos = packed[_ROW_POS:_ROW_POS + 1, :]        # lanes 0..2 = camera pos
    up = e(1)                                     # world up (0, 1, 0)
    xyz = (lane < 3).astype(jnp.float32)

    def normalize(v):                             # v / max(|v|, eps), via EUP
        n2 = jnp.sum(v * v, axis=-1, keepdims=True)
        return v * jax.lax.rsqrt(jnp.maximum(n2, _EPS * _EPS))

    def cross(a, b):
        a0, a1, a2 = a[:, 0:1], a[:, 1:2], a[:, 2:3]
        b0, b1_, b2_ = b[:, 0:1], b[:, 1:2], b[:, 2:3]
        return ((a1 * b2_ - a2 * b1_) * e(0)
                + (a2 * b0 - a0 * b2_) * e(1)
                + (a0 * b1_ - a1 * b0) * e(2))

    z_axis = normalize(-pos)                      # object `at` == origin
    x_axis = normalize(cross(up, z_axis))
    y_axis = normalize(cross(z_axis, x_axis))
    # torch.isclose(x_axis, 0, atol=0.005).all(dim=1) over the 3 components
    close = jnp.where(jnp.abs(x_axis) <= 0.005, 1.0, 0.0) * xyz
    is_close = jnp.sum(close, axis=-1, keepdims=True) > 2.5          # (1, 1)
    x_axis = jnp.where(is_close, normalize(cross(y_axis, z_axis)), x_axis)

    def t_of(axis):                               # T = -R^T @ pos, per row
        return -jnp.sum(axis * pos, axis=-1, keepdims=True)          # (1, 1)

    # ------------- resmodel stand-in head (rasterizer stubbed) --------------
    # TODO(synk): layer 1 uses the pre-reduced w1 rows; valid only while the
    # rendered image is the constant background colour (see module TODO).
    bg = packed[_ROW_BG:_ROW_BG + 1, :]
    b1 = packed[_ROW_B1:_ROW_B1 + 1, :]
    b2 = packed[_ROW_B2:_ROW_B2 + 1, :][:, 0:1]
    h = (bg[:, 0:1] * packed[_ROW_W1R0:_ROW_W1R0 + 1, :]
         + bg[:, 1:2] * packed[_ROW_W1R1:_ROW_W1R1 + 1, :]
         + bg[:, 2:3] * packed[_ROW_W1R2:_ROW_W1R2 + 1, :]
         + b1)
    h = jnp.maximum(h, 0.0)                                           # (1, 128)
    # layer 2: logical N == 1 -> VPU multiply + XLU lane-reduce, no MXU push.
    pred = jnp.sum(h * packed[_ROW_W2:_ROW_W2 + 1, :], axis=-1,
                   keepdims=True) + b2                                # (1, 1)
    # MSELoss vs torch.ones(1, 1): prediction has a single element, so the
    # mean equals the plain square (revisit if the head ever outputs > 1 elem).
    loss = (pred - 1.0) * (pred - 1.0)

    # ------------- pack everything into one lane-dense output row -----------
    rt = (x_axis[:, 0:1] * e(2) + x_axis[:, 1:2] * e(3) + x_axis[:, 2:3] * e(4)
          + t_of(x_axis) * e(5)
          + y_axis[:, 0:1] * e(6) + y_axis[:, 1:2] * e(7) + y_axis[:, 2:3] * e(8)
          + t_of(y_axis) * e(9)
          + z_axis[:, 0:1] * e(10) + z_axis[:, 1:2] * e(11) + z_axis[:, 2:3] * e(12)
          + t_of(z_axis) * e(13)
          + e(17))                                 # Rt[3] = [0, 0, 0, 1]
    out_ref[...] = pred * e(_LANE_PRED) + loss * e(_LANE_LOSS) + rt


# ----------------------------------------------------------------------------
# Parameter preparation (setup time, outside the kernel)
# ----------------------------------------------------------------------------
def prepare_head_rows(w1, b1, w2, b2, res_hw=32):
    """Pack the stand-in-head parameters into 6 lane-dense (128-wide) f32 rows.

    TODO(synk): the per-channel row-sum of w1 is valid only while the
    rasterizer stub makes the rendered image constant per channel.
    """
    d, hid = w1.shape
    assert d == 3 * res_hw * res_hw and hid <= _LANES
    pad = _LANES - hid
    # f32 reduction first, never sum in reduced precision (review note).
    w1r = jnp.pad(w1.astype(jnp.float32).reshape(3, d // 3, hid).sum(axis=1),
                  ((0, 0), (0, pad)))                                  # (3, 128)
    b1r = jnp.pad(b1.reshape(1, hid).astype(jnp.float32), ((0, 0), (0, pad)))
    w2r = jnp.pad(w2.reshape(1, hid).astype(jnp.float32), ((0, 0), (0, pad)))
    b2r = jnp.zeros((1, _LANES), jnp.float32).at[0, 0].set(
        jnp.asarray(b2, jnp.float32).reshape(()))
    return jnp.concatenate([b1r, b2r, w1r, w2r], axis=0)              # (6, 128)


# ----------------------------------------------------------------------------
# Forward pass glue (mirrors MerfNet.forward)
# ----------------------------------------------------------------------------
def merfnet_forward(camera_pos, background, gaussians, head_rows,
                    fovx=math.pi / 3, fovy=math.pi / 3, render_hw=16):
    # tan-FoV terms (only feed the rasterizer settings in the original module)
    _tanfovx = math.tan(fovx * 0.5)
    _tanfovy = math.tan(fovy * 0.5)
    del gaussians, render_hw   # consumed only by the stubbed rasterizer (TODO)

    def vec3_row(v):
        return jnp.zeros((1, _LANES), jnp.float32).at[0, :3].set(
            v.astype(jnp.float32).reshape(3))

    packed = jnp.concatenate(
        [vec3_row(camera_pos), vec3_row(background), head_rows], axis=0)  # (8,128)

    vm = pl.BlockSpec(memory_space=pltpu.MemorySpace.VMEM)
    out_vec = pl.pallas_call(
        _merf_fused_kernel,
        out_shape=jax.ShapeDtypeStruct((1, _LANES), jnp.float32),
        in_specs=[vm],
        out_specs=vm,
    )(packed)

    prediction = out_vec[:, _LANE_PRED:_LANE_PRED + 1]                 # (1, 1)
    loss = out_vec[0, _LANE_LOSS]
    Rt = out_vec[0, _LANE_RT0:_LANE_RT0 + 16].reshape(4, 4)
    return loss, prediction, Rt


# ----------------------------------------------------------------------------
# Plain numpy reference for the camera math (correctness check)
# ----------------------------------------------------------------------------
def _ref_view_matrix(pos):
    pos = np.asarray(pos, np.float64)
    at = np.zeros(3)
    up = np.array([0.0, 1.0, 0.0])
    nrm = lambda v: v / max(np.linalg.norm(v), _EPS)
    z = nrm(at - pos)
    x = nrm(np.cross(up, z))
    y = nrm(np.cross(z, x))
    if np.all(np.abs(x) <= 0.005):
        x = nrm(np.cross(y, z))
    T = -np.array([x @ pos, y @ pos, z @ pos])
    Rt = np.eye(4)
    Rt[:3, :3] = np.stack([x, y, z])
    Rt[:3, 3] = T
    return Rt.astype(np.float32)


if __name__ == "__main__":
    key = jax.random.PRNGKey(0)
    k_pos, k_bg, k_g1, k_g2, k_w1, k_w2, k_b1 = jax.random.split(key, 7)

    # camera parameter (nn.Parameter(camera.camera_center)): shape (3,)
    camera_pos = jax.random.normal(k_pos, (3,), jnp.float32) + \
        jnp.array([0.3, 0.4, 2.0], jnp.float32)
    background = jax.random.uniform(k_bg, (3,), jnp.float32)

    # synthetic gaussian-cloud tensors (shape documentation only; consumed by
    # the TODO'd rasterizer in the real module)
    n_gauss = 64
    gaussians = dict(
        means3D=jax.random.normal(k_g1, (n_gauss, 3), jnp.float32),
        opacity=jax.nn.sigmoid(jax.random.normal(k_g2, (n_gauss, 1), jnp.float32)),
        shs=jnp.zeros((n_gauss, 16, 3), jnp.float32),
        scales=jnp.ones((n_gauss, 3), jnp.float32) * 0.01,
        rotations=jnp.tile(jnp.array([1.0, 0.0, 0.0, 0.0], jnp.float32),
                           (n_gauss, 1)),
    )

    # deterministic resmodel stand-in weights (logical shapes, f32)
    RES = 32
    D = 3 * RES * RES
    w1 = jax.random.normal(k_w1, (D, HID), jnp.float32) * (1.0 / math.sqrt(D))
    b1 = jax.random.normal(k_b1, (HID,), jnp.float32) * 0.01
    w2 = jax.random.normal(k_w2, (HID, 1), jnp.float32) * (1.0 / math.sqrt(HID))
    b2 = jnp.float32(0.05)

    head_rows = prepare_head_rows(w1, b1, w2, b2, res_hw=RES)

    loss, prediction, Rt = merfnet_forward(camera_pos, background, gaussians,
                                           head_rows, render_hw=16)
    jax.block_until_ready((loss, prediction, Rt))

    # ---- correctness checks against float64 references ----
    np.testing.assert_allclose(np.asarray(Rt),
                               _ref_view_matrix(np.asarray(camera_pos)),
                               atol=1e-4, rtol=1e-4)

    # stand-in image: constant per channel (bilinear resize of a constant)
    bg64 = np.asarray(background, np.float64)
    img_flat = np.repeat(bg64, RES * RES)                       # (3072,)
    h_ref = np.maximum(img_flat @ np.asarray(w1, np.float64)
                       + np.asarray(b1, np.float64), 0.0)
    pred_ref = float(h_ref @ np.asarray(w2, np.float64)[:, 0] + float(b2))
    loss_ref = (pred_ref - 1.0) ** 2

    np.testing.assert_allclose(float(np.asarray(prediction).reshape(())),
                               pred_ref, atol=1e-4, rtol=1e-4)
    np.testing.assert_allclose(float(loss), loss_ref, atol=1e-4, rtol=1e-4)

    print("KERNEL_OK")
</pallas_src>

<mosaic_0001>
module attributes {stable_mosaic.version = 11 : i64} {
  func.func @_merf_fused_kernel(%arg0: memref<8x128xf32, #tpu.memory_space<vmem>>, %arg1: memref<1x128xf32, #tpu.memory_space<vmem>>) attributes {dimension_semantics = [], scalar_prefetch = 0 : i64, scratch_operands = 0 : i64, tpu.core_type = #tpu.core_type<tc>} {
    %c0 = arith.constant 0 : index
    %c0_0 = arith.constant 0 : index
    %0 = vector.load %arg0[%c0, %c0_0] : memref<8x128xf32, #tpu.memory_space<vmem>>, vector<8x128xf32>
    %1 = tpu.iota {dimensions = array<i32: 1>} : vector<1x128xi32>
    %2 = vector.extract_strided_slice %0 {offsets = [0, 0], sizes = [1, 128], strides = [1, 1]} : vector<8x128xf32> to vector<1x128xf32>
    %c1_i32 = arith.constant 1 : i32
    %3 = vector.broadcast %c1_i32 : i32 to vector<1x128xi32>
    %4 = arith.cmpi eq, %1, %3 : vector<1x128xi32>
    %5 = arith.extui %4 : vector<1x128xi1> to vector<1x128xi32>
    %6 = arith.sitofp %5 : vector<1x128xi32> to vector<1x128xf32>
    %c3_i32 = arith.constant 3 : i32
    %7 = vector.broadcast %c3_i32 : i32 to vector<1x128xi32>
    %8 = arith.cmpi slt, %1, %7 : vector<1x128xi32>
    %9 = arith.extui %8 : vector<1x128xi1> to vector<1x128xi32>
    %10 = arith.sitofp %9 : vector<1x128xi32> to vector<1x128xf32>
    %cst = arith.constant 0.000000e+00 : f32
    %11 = vector.broadcast %cst : f32 to vector<1x128xf32>
    %12 = arith.subf %11, %2 : vector<1x128xf32>
    %13 = arith.mulf %12, %12 : vector<1x128xf32>
    %cst_1 = arith.constant dense<0.000000e+00> : vector<1xf32>
    %14 = vector.multi_reduction <add>, %13, %cst_1 [1] : vector<1x128xf32> to vector<1xf32>
    %15 = vector.shape_cast %14 : vector<1xf32> to vector<1x1xf32>
    %cst_2 = arith.constant 1.000000e-10 : f32
    %16 = vector.broadcast %cst_2 : f32 to vector<1x1xf32>
    %17 = arith.maximumf %15, %16 : vector<1x1xf32>
    %18 = math.rsqrt %17 : vector<1x1xf32>
    %19 = vector.broadcast %18 : vector<1x1xf32> to vector<1x128xf32>
    %20 = arith.mulf %12, %19 : vector<1x128xf32>
    %21 = vector.extract_strided_slice %6 {offsets = [0, 0], sizes = [1, 1], strides = [1, 1]} : vector<1x128xf32> to vector<1x1xf32>
    %22 = vector.extract_strided_slice %6 {offsets = [0, 1], sizes = [1, 1], strides = [1, 1]} : vector<1x128xf32> to vector<1x1xf32>
    %23 = vector.extract_strided_slice %6 {offsets = [0, 2], sizes = [1, 1], strides = [1, 1]} : vector<1x128xf32> to vector<1x1xf32>
    %24 = vector.extract_strided_slice %20 {offsets = [0, 0], sizes = [1, 1], strides = [1, 1]} : vector<1x128xf32> to vector<1x1xf32>
    %25 = vector.extract_strided_slice %20 {offsets = [0, 1], sizes = [1, 1], strides = [1, 1]} : vector<1x128xf32> to vector<1x1xf32>
    %26 = vector.extract_strided_slice %20 {offsets = [0, 2], sizes = [1, 1], strides = [1, 1]} : vector<1x128xf32> to vector<1x1xf32>
    %27 = arith.mulf %22, %26 : vector<1x1xf32>
    %28 = arith.mulf %23, %25 : vector<1x1xf32>
    %29 = arith.subf %27, %28 : vector<1x1xf32>
    %c0_i32 = arith.constant 0 : i32
    %30 = vector.broadcast %c0_i32 : i32 to vector<1x128xi32>
    %31 = arith.cmpi eq, %1, %30 : vector<1x128xi32>
    %32 = arith.extui %31 : vector<1x128xi1> to vector<1x128xi32>
    %33 = arith.sitofp %32 : vector<1x128xi32> to vector<1x128xf32>
    %34 = vector.broadcast %29 : vector<1x1xf32> to vector<1x128xf32>
    %35 = arith.mulf %34, %33 : vector<1x128xf32>
    %36 = arith.mulf %23, %24 : vector<1x1xf32>
    %37 = arith.mulf %21, %26 : vector<1x1xf32>
    %38 = arith.subf %36, %37 : vector<1x1xf32>
    %c1_i32_3 = arith.constant 1 : i32
    %39 = vector.broadcast %c1_i32_3 : i32 to vector<1x128xi32>
    %40 = arith.cmpi eq, %1, %39 : vector<1x128xi32>
    %41 = arith.extui %40 : vector<1x128xi1> to vector<1x128xi32>
    %42 = arith.sitofp %41 : vector<1x128xi32> to vector<1x128xf32>
    %43 = vector.broadcast %38 : vector<1x1xf32> to vector<1x128xf32>
    %44 = arith.mulf %43, %42 : vector<1x128xf32>
    %45 = arith.addf %35, %44 : vector<1x128xf32>
    %46 = arith.mulf %21, %25 : vector<1x1xf32>
    %47 = arith.mulf %22, %24 : vector<1x1xf32>
    %48 = arith.subf %46, %47 : vector<1x1xf32>
    %c2_i32 = arith.constant 2 : i32
    %49 = vector.broadcast %c2_i32 : i32 to vector<1x128xi32>
    %50 = arith.cmpi eq, %1, %49 : vector<1x128xi32>
    %51 = arith.extui %50 : vector<1x128xi1> to vector<1x128xi32>
    %52 = arith.sitofp %51 : vector<1x128xi32> to vector<1x128xf32>
    %53 = vector.broadcast %48 : vector<1x1xf32> to vector<1x128xf32>
    %54 = arith.mulf %53, %52 : vector<1x128xf32>
    %55 = arith.addf %45, %54 : vector<1x128xf32>
    %56 = arith.mulf %55, %55 : vector<1x128xf32>
    %cst_4 = arith.constant dense<0.000000e+00> : vector<1xf32>
    %57 = vector.multi_reduction <add>, %56, %cst_4 [1] : vector<1x128xf32> to vector<1xf32>
    %58 = vector.shape_cast %57 : vector<1xf32> to vector<1x1xf32>
    %cst_5 = arith.constant 1.000000e-10 : f32
    %59 = vector.broadcast %cst_5 : f32 to vector<1x1xf32>
    %60 = arith.maximumf %58, %59 : vector<1x1xf32>
    %61 = math.rsqrt %60 : vector<1x1xf32>
    %62 = vector.broadcast %61 : vector<1x1xf32> to vector<1x128xf32>
    %63 = arith.mulf %55, %62 : vector<1x128xf32>
    %64 = vector.extract_strided_slice %20 {offsets = [0, 0], sizes = [1, 1], strides = [1, 1]} : vector<1x128xf32> to vector<1x1xf32>
    %65 = vector.extract_strided_slice %20 {offsets = [0, 1], sizes = [1, 1], strides = [1, 1]} : vector<1x128xf32> to vector<1x1xf32>
    %66 = vector.extract_strided_slice %20 {offsets = [0, 2], sizes = [1, 1], strides = [1, 1]} : vector<1x128xf32> to vector<1x1xf32>
    %67 = vector.extract_strided_slice %63 {offsets = [0, 0], sizes = [1, 1], strides = [1, 1]} : vector<1x128xf32> to vector<1x1xf32>
    %68 = vector.extract_strided_slice %63 {offsets = [0, 1], sizes = [1, 1], strides = [1, 1]} : vector<1x128xf32> to vector<1x1xf32>
    %69 = vector.extract_strided_slice %63 {offsets = [0, 2], sizes = [1, 1], strides = [1, 1]} : vector<1x128xf32> to vector<1x1xf32>
    %70 = arith.mulf %65, %69 : vector<1x1xf32>
    %71 = arith.mulf %66, %68 : vector<1x1xf32>
    %72 = arith.subf %70, %71 : vector<1x1xf32>
    %c0_i32_6 = arith.constant 0 : i32
    %73 = vector.broadcast %c0_i32_6 : i32 to vector<1x128xi32>
    %74 = arith.cmpi eq, %1, %73 : vector<1x128xi32>
    %75 = arith.extui %74 : vector<1x128xi1> to vector<1x128xi32>
    %76 = arith.sitofp %75 : vector<1x128xi32> to vector<1x128xf32>
    %77 = vector.broadcast %72 : vector<1x1xf32> to vector<1x128xf32>
    %78 = arith.mulf %77, %76 : vector<1x128xf32>
    %79 = arith.mulf %66, %67 : vector<1x1xf32>
    %80 = arith.mulf %64, %69 : vector<1x1xf32>
    %81 = arith.subf %79, %80 : vector<1x1xf32>
    %c1_i32_7 = arith.constant 1 : i32
    %82 = vector.broadcast %c1_i32_7 : i32 to vector<1x128xi32>
    %83 = arith.cmpi eq, %1, %82 : vector<1x128xi32>
    %84 = arith.extui %83 : vector<1x128xi1> to vector<1x128xi32>
    %85 = arith.sitofp %84 : vector<1x128xi32> to vector<1x128xf32>
    %86 = vector.broadcast %81 : vector<1x1xf32> to vector<1x128xf32>
    %87 = arith.mulf %86, %85 : vector<1x128xf32>
    %88 = arith.addf %78, %87 : vector<1x128xf32>
    %89 = arith.mulf %64, %68 : vector<1x1xf32>
    %90 = arith.mulf %65, %67 : vector<1x1xf32>
    %91 = arith.subf %89, %90 : vector<1x1xf32>
    %c2_i32_8 = arith.constant 2 : i32
    %92 = vector.broadcast %c2_i32_8 : i32 to vector<1x128xi32>
    %93 = arith.cmpi eq, %1, %92 : vector<1x128xi32>
    %94 = arith.extui %93 : vector<1x128xi1> to vector<1x128xi32>
    %95 = arith.sitofp %94 : vector<1x128xi32> to vector<1x128xf32>
    %96 = vector.broadcast %91 : vector<1x1xf32> to vector<1x128xf32>
    %97 = arith.mulf %96, %95 : vector<1x128xf32>
    %98 = arith.addf %88, %97 : vector<1x128xf32>
    %99 = arith.mulf %98, %98 : vector<1x128xf32>
    %cst_9 = arith.constant dense<0.000000e+00> : vector<1xf32>
    %100 = vector.multi_reduction <add>, %99, %cst_9 [1] : vector<1x128xf32> to vector<1xf32>
    %101 = vector.shape_cast %100 : vector<1xf32> to vector<1x1xf32>
    %cst_10 = arith.constant 1.000000e-10 : f32
    %102 = vector.broadcast %cst_10 : f32 to vector<1x1xf32>
    %103 = arith.maximumf %101, %102 : vector<1x1xf32>
    %104 = math.rsqrt %103 : vector<1x1xf32>
    %105 = vector.broadcast %104 : vector<1x1xf32> to vector<1x128xf32>
    %106 = arith.mulf %98, %105 : vector<1x128xf32>
    %107 = math.absf %63 : vector<1x128xf32>
    %cst_11 = arith.constant 5.000000e-03 : f32
    %108 = vector.broadcast %cst_11 : f32 to vector<1x128xf32>
    %109 = arith.cmpf ole, %107, %108 : vector<1x128xf32>
    %cst_12 = arith.constant 1.000000e+00 : f32
    %cst_13 = arith.constant 0.000000e+00 : f32
    %110 = vector.broadcast %cst_12 : f32 to vector<1x128xf32>
    %111 = vector.broadcast %cst_13 : f32 to vector<1x128xf32>
    %112 = arith.select %109, %110, %111 : vector<1x128xi1>, vector<1x128xf32>
    %113 = arith.mulf %112, %10 : vector<1x128xf32>
    %cst_14 = arith.constant dense<0.000000e+00> : vector<1xf32>
    %114 = vector.multi_reduction <add>, %113, %cst_14 [1] : vector<1x128xf32> to vector<1xf32>
    %115 = vector.shape_cast %114 : vector<1xf32> to vector<1x1xf32>
    %cst_15 = arith.constant 2.500000e+00 : f32
    %116 = vector.broadcast %cst_15 : f32 to vector<1x1xf32>
    %117 = arith.cmpf ogt, %115, %116 : vector<1x1xf32>
    %118 = vector.extract_strided_slice %106 {offsets = [0, 0], sizes = [1, 1], strides = [1, 1]} : vector<1x128xf32> to vector<1x1xf32>
    %119 = vector.extract_strided_slice %106 {offsets = [0, 1], sizes = [1, 1], strides = [1, 1]} : vector<1x128xf32> to vector<1x1xf32>
    %120 = vector.extract_strided_slice %106 {offsets = [0, 2], sizes = [1, 1], strides = [1, 1]} : vector<1x128xf32> to vector<1x1xf32>
    %121 = vector.extract_strided_slice %20 {offsets = [0, 0], sizes = [1, 1], strides = [1, 1]} : vector<1x128xf32> to vector<1x1xf32>
    %122 = vector.extract_strided_slice %20 {offsets = [0, 1], sizes = [1, 1], strides = [1, 1]} : vector<1x128xf32> to vector<1x1xf32>
    %123 = vector.extract_strided_slice %20 {offsets = [0, 2], sizes = [1, 1], strides = [1, 1]} : vector<1x128xf32> to vector<1x1xf32>
    %124 = arith.mulf %119, %123 : vector<1x1xf32>
    %125 = arith.mulf %120, %122 : vector<1x1xf32>
    %126 = arith.subf %124, %125 : vector<1x1xf32>
    %c0_i32_16 = arith.constant 0 : i32
    %127 = vector.broadcast %c0_i32_16 : i32 to vector<1x128xi32>
    %128 = arith.cmpi eq, %1, %127 : vector<1x128xi32>
    %129 = arith.extui %128 : vector<1x128xi1> to vector<1x128xi32>
    %130 = arith.sitofp %129 : vector<1x128xi32> to vector<1x128xf32>
    %131 = vector.broadcast %126 : vector<1x1xf32> to vector<1x128xf32>
    %132 = arith.mulf %131, %130 : vector<1x128xf32>
    %133 = arith.mulf %120, %121 : vector<1x1xf32>
    %134 = arith.mulf %118, %123 : vector<1x1xf32>
    %135 = arith.subf %133, %134 : vector<1x1xf32>
    %c1_i32_17 = arith.constant 1 : i32
    %136 = vector.broadcast %c1_i32_17 : i32 to vector<1x128xi32>
    %137 = arith.cmpi eq, %1, %136 : vector<1x128xi32>
    %138 = arith.extui %137 : vector<1x128xi1> to vector<1x128xi32>
    %139 = arith.sitofp %138 : vector<1x128xi32> to vector<1x128xf32>
    %140 = vector.broadcast %135 : vector<1x1xf32> to vector<1x128xf32>
    %141 = arith.mulf %140, %139 : vector<1x128xf32>
    %142 = arith.addf %132, %141 : vector<1x128xf32>
    %143 = arith.mulf %118, %122 : vector<1x1xf32>
    %144 = arith.mulf %119, %121 : vector<1x1xf32>
    %145 = arith.subf %143, %144 : vector<1x1xf32>
    %c2_i32_18 = arith.constant 2 : i32
    %146 = vector.broadcast %c2_i32_18 : i32 to vector<1x128xi32>
    %147 = arith.cmpi eq, %1, %146 : vector<1x128xi32>
    %148 = arith.extui %147 : vector<1x128xi1> to vector<1x128xi32>
    %149 = arith.sitofp %148 : vector<1x128xi32> to vector<1x128xf32>
    %150 = vector.broadcast %145 : vector<1x1xf32> to vector<1x128xf32>
    %151 = arith.mulf %150, %149 : vector<1x128xf32>
    %152 = arith.addf %142, %151 : vector<1x128xf32>
    %153 = arith.mulf %152, %152 : vector<1x128xf32>
    %cst_19 = arith.constant dense<0.000000e+00> : vector<1xf32>
    %154 = vector.multi_reduction <add>, %153, %cst_19 [1] : vector<1x128xf32> to vector<1xf32>
    %155 = vector.shape_cast %154 : vector<1xf32> to vector<1x1xf32>
    %cst_20 = arith.constant 1.000000e-10 : f32
    %156 = vector.broadcast %cst_20 : f32 to vector<1x1xf32>
    %157 = arith.maximumf %155, %156 : vector<1x1xf32>
    %158 = math.rsqrt %157 : vector<1x1xf32>
    %159 = vector.broadcast %158 : vector<1x1xf32> to vector<1x128xf32>
    %160 = arith.mulf %152, %159 : vector<1x128xf32>
    %161 = vector.shape_cast %117 : vector<1x1xi1> to vector<1x1xi1>
    %162 = vector.broadcast %161 : vector<1x1xi1> to vector<1x128xi1>
    %163 = arith.select %162, %160, %63 : vector<1x128xi1>, vector<1x128xf32>
    %164 = vector.extract_strided_slice %0 {offsets = [1, 0], sizes = [1, 128], strides = [1, 1]} : vector<8x128xf32> to vector<1x128xf32>
    %165 = vector.extract_strided_slice %0 {offsets = [2, 0], sizes = [1, 128], strides = [1, 1]} : vector<8x128xf32> to vector<1x128xf32>
    %166 = vector.extract_strided_slice %0 {offsets = [3, 0], sizes = [1, 128], strides = [1, 1]} : vector<8x128xf32> to vector<1x128xf32>
    %167 = vector.extract_strided_slice %166 {offsets = [0, 0], sizes = [1, 1], strides = [1, 1]} : vector<1x128xf32> to vector<1x1xf32>
    %168 = vector.extract_strided_slice %164 {offsets = [0, 0], sizes = [1, 1], strides = [1, 1]} : vector<1x128xf32> to vector<1x1xf32>
    %169 = vector.extract_strided_slice %0 {offsets = [4, 0], sizes = [1, 128], strides = [1, 1]} : vector<8x128xf32> to vector<1x128xf32>
    %170 = vector.broadcast %168 : vector<1x1xf32> to vector<1x128xf32>
    %171 = arith.mulf %170, %169 : vector<1x128xf32>
    %172 = vector.extract_strided_slice %164 {offsets = [0, 1], sizes = [1, 1], strides = [1, 1]} : vector<1x128xf32> to vector<1x1xf32>
    %173 = vector.extract_strided_slice %0 {offsets = [5, 0], sizes = [1, 128], strides = [1, 1]} : vector<8x128xf32> to vector<1x128xf32>
    %174 = vector.broadcast %172 : vector<1x1xf32> to vector<1x128xf32>
    %175 = arith.mulf %174, %173 : vector<1x128xf32>
    %176 = arith.addf %171, %175 : vector<1x128xf32>
    %177 = vector.extract_strided_slice %164 {offsets = [0, 2], sizes = [1, 1], strides = [1, 1]} : vector<1x128xf32> to vector<1x1xf32>
    %178 = vector.extract_strided_slice %0 {offsets = [6, 0], sizes = [1, 128], strides = [1, 1]} : vector<8x128xf32> to vector<1x128xf32>
    %179 = vector.broadcast %177 : vector<1x1xf32> to vector<1x128xf32>
    %180 = arith.mulf %179, %178 : vector<1x128xf32>
    %181 = arith.addf %176, %180 : vector<1x128xf32>
    %182 = arith.addf %181, %165 : vector<1x128xf32>
    %cst_21 = arith.constant 0.000000e+00 : f32
    %183 = vector.broadcast %cst_21 : f32 to vector<1x128xf32>
    %184 = arith.maximumf %182, %183 : vector<1x128xf32>
    %185 = vector.extract_strided_slice %0 {offsets = [7, 0], sizes = [1, 128], strides = [1, 1]} : vector<8x128xf32> to vector<1x128xf32>
    %186 = arith.mulf %184, %185 : vector<1x128xf32>
    %cst_22 = arith.constant dense<0.000000e+00> : vector<1xf32>
    %187 = vector.multi_reduction <add>, %186, %cst_22 [1] : vector<1x128xf32> to vector<1xf32>
    %188 = vector.shape_cast %187 : vector<1xf32> to vector<1x1xf32>
    %189 = arith.addf %188, %167 : vector<1x1xf32>
    %cst_23 = arith.constant 1.000000e+00 : f32
    %190 = vector.broadcast %cst_23 : f32 to vector<1x1xf32>
    %191 = arith.subf %189, %190 : vector<1x1xf32>
    %cst_24 = arith.constant 1.000000e+00 : f32
    %192 = vector.broadcast %cst_24 : f32 to vector<1x1xf32>
    %193 = arith.subf %189, %192 : vector<1x1xf32>
    %194 = arith.mulf %191, %193 : vector<1x1xf32>
    %195 = vector.extract_strided_slice %163 {offsets = [0, 0], sizes = [1, 1], strides = [1, 1]} : vector<1x128xf32> to vector<1x1xf32>
    %c2_i32_25 = arith.constant 2 : i32
    %196 = vector.broadcast %c2_i32_25 : i32 to vector<1x128xi32>
    %197 = arith.cmpi eq, %1, %196 : vector<1x128xi32>
    %198 = arith.extui %197 : vector<1x128xi1> to vector<1x128xi32>
    %199 = arith.sitofp %198 : vector<1x128xi32> to vector<1x128xf32>
    %200 = vector.broadcast %195 : vector<1x1xf32> to vector<1x128xf32>
    %201 = arith.mulf %200, %199 : vector<1x128xf32>
    %202 = vector.extract_strided_slice %163 {offsets = [0, 1], sizes = [1, 1], strides = [1, 1]} : vector<1x128xf32> to vector<1x1xf32>
    %c3_i32_26 = arith.constant 3 : i32
    %203 = vector.broadcast %c3_i32_26 : i32 to vector<1x128xi32>
    %204 = arith.cmpi eq, %1, %203 : vector<1x128xi32>
    %205 = arith.extui %204 : vector<1x128xi1> to vector<1x128xi32>
    %206 = arith.sitofp %205 : vector<1x128xi32> to vector<1x128xf32>
    %207 = vector.broadcast %202 : vector<1x1xf32> to vector<1x128xf32>
    %208 = arith.mulf %207, %206 : vector<1x128xf32>
    %209 = arith.addf %201, %208 : vector<1x128xf32>
    %210 = vector.extract_strided_slice %163 {offsets = [0, 2], sizes = [1, 1], strides = [1, 1]} : vector<1x128xf32> to vector<1x1xf32>
    %c4_i32 = arith.constant 4 : i32
    %211 = vector.broadcast %c4_i32 : i32 to vector<1x128xi32>
    %212 = arith.cmpi eq, %1, %211 : vector<1x128xi32>
    %213 = arith.extui %212 : vector<1x128xi1> to vector<1x128xi32>
    %214 = arith.sitofp %213 : vector<1x128xi32> to vector<1x128xf32>
    %215 = vector.broadcast %210 : vector<1x1xf32> to vector<1x128xf32>
    %216 = arith.mulf %215, %214 : vector<1x128xf32>
    %217 = arith.addf %209, %216 : vector<1x128xf32>
    %218 = arith.mulf %163, %2 : vector<1x128xf32>
    %cst_27 = arith.constant dense<0.000000e+00> : vector<1xf32>
    %219 = vector.multi_reduction <add>, %218, %cst_27 [1] : vector<1x128xf32> to vector<1xf32>
    %220 = vector.shape_cast %219 : vector<1xf32> to vector<1x1xf32>
    %cst_28 = arith.constant 0.000000e+00 : f32
    %221 = vector.broadcast %cst_28 : f32 to vector<1x1xf32>
    %222 = arith.subf %221, %220 : vector<1x1xf32>
    %c5_i32 = arith.constant 5 : i32
    %223 = vector.broadcast %c5_i32 : i32 to vector<1x128xi32>
    %224 = arith.cmpi eq, %1, %223 : vector<1x128xi32>
    %225 = arith.extui %224 : vector<1x128xi1> to vector<1x128xi32>
    %226 = arith.sitofp %225 : vector<1x128xi32> to vector<1x128xf32>
    %227 = vector.broadcast %222 : vector<1x1xf32> to vector<1x128xf32>
    %228 = arith.mulf %227, %226 : vector<1x128xf32>
    %229 = arith.addf %217, %228 : vector<1x128xf32>
    %230 = vector.extract_strided_slice %106 {offsets = [0, 0], sizes = [1, 1], strides = [1, 1]} : vector<1x128xf32> to vector<1x1xf32>
    %c6_i32 = arith.constant 6 : i32
    %231 = vector.broadcast %c6_i32 : i32 to vector<1x128xi32>
    %232 = arith.cmpi eq, %1, %231 : vector<1x128xi32>
    %233 = arith.extui %232 : vector<1x128xi1> to vector<1x128xi32>
    %234 = arith.sitofp %233 : vector<1x128xi32> to vector<1x128xf32>
    %235 = vector.broadcast %230 : vector<1x1xf32> to vector<1x128xf32>
    %236 = arith.mulf %235, %234 : vector<1x128xf32>
    %237 = arith.addf %229, %236 : vector<1x128xf32>
    %238 = vector.extract_strided_slice %106 {offsets = [0, 1], sizes = [1, 1], strides = [1, 1]} : vector<1x128xf32> to vector<1x1xf32>
    %c7_i32 = arith.constant 7 : i32
    %239 = vector.broadcast %c7_i32 : i32 to vector<1x128xi32>
    %240 = arith.cmpi eq, %1, %239 : vector<1x128xi32>
    %241 = arith.extui %240 : vector<1x128xi1> to vector<1x128xi32>
    %242 = arith.sitofp %241 : vector<1x128xi32> to vector<1x128xf32>
    %243 = vector.broadcast %238 : vector<1x1xf32> to vector<1x128xf32>
    %244 = arith.mulf %243, %242 : vector<1x128xf32>
    %245 = arith.addf %237, %244 : vector<1x128xf32>
    %246 = vector.extract_strided_slice %106 {offsets = [0, 2], sizes = [1, 1], strides = [1, 1]} : vector<1x128xf32> to vector<1x1xf32>
    %c8_i32 = arith.constant 8 : i32
    %247 = vector.broadcast %c8_i32 : i32 to vector<1x128xi32>
    %248 = arith.cmpi eq, %1, %247 : vector<1x128xi32>
    %249 = arith.extui %248 : vector<1x128xi1> to vector<1x128xi32>
    %250 = arith.sitofp %249 : vector<1x128xi32> to vector<1x128xf32>
    %251 = vector.broadcast %246 : vector<1x1xf32> to vector<1x128xf32>
    %252 = arith.mulf %251, %250 : vector<1x128xf32>
    %253 = arith.addf %245, %252 : vector<1x128xf32>
    %254 = arith.mulf %106, %2 : vector<1x128xf32>
    %cst_29 = arith.constant dense<0.000000e+00> : vector<1xf32>
    %255 = vector.multi_reduction <add>, %254, %cst_29 [1] : vector<1x128xf32> to vector<1xf32>
    %256 = vector.shape_cast %255 : vector<1xf32> to vector<1x1xf32>
    %cst_30 = arith.constant 0.000000e+00 : f32
    %257 = vector.broadcast %cst_30 : f32 to vector<1x1xf32>
    %258 = arith.subf %257, %256 : vector<1x1xf32>
    %c9_i32 = arith.constant 9 : i32
    %259 = vector.broadcast %c9_i32 : i32 to vector<1x128xi32>
    %260 = arith.cmpi eq, %1, %259 : vector<1x128xi32>
    %261 = arith.extui %260 : vector<1x128xi1> to vector<1x128xi32>
    %262 = arith.sitofp %261 : vector<1x128xi32> to vector<1x128xf32>
    %263 = vector.broadcast %258 : vector<1x1xf32> to vector<1x128xf32>
    %264 = arith.mulf %263, %262 : vector<1x128xf32>
    %265 = arith.addf %253, %264 : vector<1x128xf32>
    %266 = vector.extract_strided_slice %20 {offsets = [0, 0], sizes = [1, 1], strides = [1, 1]} : vector<1x128xf32> to vector<1x1xf32>
    %c10_i32 = arith.constant 10 : i32
    %267 = vector.broadcast %c10_i32 : i32 to vector<1x128xi32>
    %268 = arith.cmpi eq, %1, %267 : vector<1x128xi32>
    %269 = arith.extui %268 : vector<1x128xi1> to vector<1x128xi32>
    %270 = arith.sitofp %269 : vector<1x128xi32> to vector<1x128xf32>
    %271 = vector.broadcast %266 : vector<1x1xf32> to vector<1x128xf32>
    %272 = arith.mulf %271, %270 : vector<1x128xf32>
    %273 = arith.addf %265, %272 : vector<1x128xf32>
    %274 = vector.extract_strided_slice %20 {offsets = [0, 1], sizes = [1, 1], strides = [1, 1]} : vector<1x128xf32> to vector<1x1xf32>
    %c11_i32 = arith.constant 11 : i32
    %275 = vector.broadcast %c11_i32 : i32 to vector<1x128xi32>
    %276 = arith.cmpi eq, %1, %275 : vector<1x128xi32>
    %277 = arith.extui %276 : vector<1x128xi1> to vector<1x128xi32>
    %278 = arith.sitofp %277 : vector<1x128xi32> to vector<1x128xf32>
    %279 = vector.broadcast %274 : vector<1x1xf32> to vector<1x128xf32>
    %280 = arith.mulf %279, %278 : vector<1x128xf32>
    %281 = arith.addf %273, %280 : vector<1x128xf32>
    %282 = vector.extract_strided_slice %20 {offsets = [0, 2], sizes = [1, 1], strides = [1, 1]} : vector<1x128xf32> to vector<1x1xf32>
    %c12_i32 = arith.constant 12 : i32
    %283 = vector.broadcast %c12_i32 : i32 to vector<1x128xi32>
    %284 = arith.cmpi eq, %1, %283 : vector<1x128xi32>
    %285 = arith.extui %284 : vector<1x128xi1> to vector<1x128xi32>
    %286 = arith.sitofp %285 : vector<1x128xi32> to vector<1x128xf32>
    %287 = vector.broadcast %282 : vector<1x1xf32> to vector<1x128xf32>
    %288 = arith.mulf %287, %286 : vector<1x128xf32>
    %289 = arith.addf %281, %288 : vector<1x128xf32>
    %290 = arith.mulf %20, %2 : vector<1x128xf32>
    %cst_31 = arith.constant dense<0.000000e+00> : vector<1xf32>
    %291 = vector.multi_reduction <add>, %290, %cst_31 [1] : vector<1x128xf32> to vector<1xf32>
    %292 = vector.shape_cast %291 : vector<1xf32> to vector<1x1xf32>
    %cst_32 = arith.constant 0.000000e+00 : f32
    %293 = vector.broadcast %cst_32 : f32 to vector<1x1xf32>
    %294 = arith.subf %293, %292 : vector<1x1xf32>
    %c13_i32 = arith.constant 13 : i32
    %295 = vector.broadcast %c13_i32 : i32 to vector<1x128xi32>
    %296 = arith.cmpi eq, %1, %295 : vector<1x128xi32>
    %297 = arith.extui %296 : vector<1x128xi1> to vector<1x128xi32>
    %298 = arith.sitofp %297 : vector<1x128xi32> to vector<1x128xf32>
    %299 = vector.broadcast %294 : vector<1x1xf32> to vector<1x128xf32>
    %300 = arith.mulf %299, %298 : vector<1x128xf32>
    %301 = arith.addf %289, %300 : vector<1x128xf32>
    %c17_i32 = arith.constant 17 : i32
    %302 = vector.broadcast %c17_i32 : i32 to vector<1x128xi32>
    %303 = arith.cmpi eq, %1, %302 : vector<1x128xi32>
    %304 = arith.extui %303 : vector<1x128xi1> to vector<1x128xi32>
    %305 = arith.sitofp %304 : vector<1x128xi32> to vector<1x128xf32>
    %306 = arith.addf %301, %305 : vector<1x128xf32>
    %c0_i32_33 = arith.constant 0 : i32
    %307 = vector.broadcast %c0_i32_33 : i32 to vector<1x128xi32>
    %308 = arith.cmpi eq, %1, %307 : vector<1x128xi32>
    %309 = arith.extui %308 : vector<1x128xi1> to vector<1x128xi32>
    %310 = arith.sitofp %309 : vector<1x128xi32> to vector<1x128xf32>
    %311 = vector.broadcast %189 : vector<1x1xf32> to vector<1x128xf32>
    %312 = arith.mulf %311, %310 : vector<1x128xf32>
    %c1_i32_34 = arith.constant 1 : i32
    %313 = vector.broadcast %c1_i32_34 : i32 to vector<1x128xi32>
    %314 = arith.cmpi eq, %1, %313 : vector<1x128xi32>
    %315 = arith.extui %314 : vector<1x128xi1> to vector<1x128xi32>
    %316 = arith.sitofp %315 : vector<1x128xi32> to vector<1x128xf32>
    %317 = vector.broadcast %194 : vector<1x1xf32> to vector<1x128xf32>
    %318 = arith.mulf %317, %316 : vector<1x128xf32>
    %319 = arith.addf %312, %318 : vector<1x128xf32>
    %320 = arith.addf %319, %306 : vector<1x128xf32>
    %c0_35 = arith.constant 0 : index
    %c0_36 = arith.constant 0 : index
    %321 = vector.load %arg1[%c0_35, %c0_36] : memref<1x128xf32, #tpu.memory_space<vmem>>, vector<1x128xf32>
    tpu.vector_store %arg1[%c0_35, %c0_36], %320 {strides = array<i32>} : memref<1x128xf32, #tpu.memory_space<vmem>>, vector<1x128xf32>,
    return
  }
}

</mosaic_0001>

<llo_original>
// kernel: tpu_custom_call.1
$region0: #{tpu_custom_call.1}
  #allocation0 [shape = 'u32[]', space=smem, size = 0x4, offset = 0x4, fixed_abs, tag = 'smem constant byte address 0x4 - core index']
  #allocation1 [shape = 'u32[144,128]{1,0:T(1,128)}', space=vmem, size = 0x12000, scoped, tag = 'internal scratch']
  %s0 = inlined_call_operand.hbm [shape: f32[8,128], index: 0, kind: input, shape index: {}]
  %s1 = inlined_call_operand.hbm [shape: f32[1,128], index: 1, kind: output, shape index: {}]
  %s2 = sld [smem:[#allocation0]]
  $region18: #{tpu_custom_call.1} parent=0
    _
  %s4 = ssub.s32 1, %s2
  %s5 = scalar_select 0, %s4, %s2
  $region1: #{tpu_custom_call.1} parent=0
    #allocation2 [shape = 'u8[4096]{0}', space=vmem, size = 0x1000, scoped, tag = 'input window, operand 0, single buffered']
    #allocation3 [shape = 's32[1]{0}', space=sflag, size = 0x4, scoped, tag = 'scoped memory for tpu_custom_call.1']
    #allocation4 [shape = 's32[1]{0}', space=sflag, size = 0x4, scoped, tag = 'scoped memory for tpu_custom_call.1']
    #allocation5 [shape = 'u8[512]{0}', space=vmem, size = 0x400, scoped, tag = 'output window, operand 0, single buffered']
    %6 = vsyncpa [#allocation3], 0
    %7 = vsyncpa [#allocation4], 0
    // Predicated region
    $region2: #{tpu_custom_call.1} parent=1 // pred_check
      _
    $region3: #{tpu_custom_call.1} parent=1 // pred_check_branch
      %9 = sbr.rel (0) target = $region5
    $region4: #{tpu_custom_call.1} parent=1 // pred_region
      %s11 = ssub.s32 128, 128
      %12 = vsyncadd [#allocation3], %s11
      %s14 = sshll.u32 [#allocation2], 4
      %s15 = int_to_ptr.vmem [resolvable:$true] %s14
      %17 = dma.hbm_to_vmem [thread:$0]  %s0, 128, %s15, [#allocation3]
    $region5: #{tpu_custom_call.1} parent=1 // pred_fallthru
      _
    // Predicated region
    $region6: #{tpu_custom_call.1} parent=1 // pred_check
      _
    $region7: #{tpu_custom_call.1} parent=1 // pred_check_branch
      %19 = sbr.rel (0) target = $region9
    $region8: #{tpu_custom_call.1} parent=1 // pred_region
      %20 = dma.done [#allocation3], 128
    $region9: #{tpu_custom_call.1} parent=1 // pred_fallthru
      _
    %v21 = vld [vmem:[#allocation2] sm:$0xff]
    %v22 = vlaneseq
    %v23 = vand.u32 %v22, 127
    %vm24 = vcmp.eq.s32.totalorder %v23, 1
    %v25 = vsel %vm24, 1, 0
    %v26 = vcvt.s32.f32 %v25
    %vm27 = vcmp.lt.s32.totalorder %v23, 3
    %v28 = vsel %vm27, 1, 0
    %v29 = vcvt.s32.f32 %v28
    %v30 = vsub.f32 0.0, %v21
    %v31 = vmul.f32 %v30, %v30
    %vm32 = vcmask 1040384
    %v33 = vsel %vm32, %v31, 0.0
    %34 = vadd.xlane.f32.xlu0 %v33
    %v35 = vpop.xlane.xlu0 %34
    %v36 = vmax.f32 %v35, 1e-10
    %v37 = vrsqrt.pop %v36
    %v38 = vmul.f32 %v30, %v37
    %40 = vrot.lane.b32.xlu0 %v38, 127
    %v41 = vpop.permute.xlu0 %40
    %v43 = vmul.f32 %v26, %v41
    %44 = vrot.lane.b32.xlu0 %v38, 1
    %v45 = vpop.permute.xlu0 %44
    %v47 = vmul.f32 %v26, %v45
    %49 = vrot.lane.b32.xlu0 %v47, 127
    %v50 = vpop.permute.xlu0 %49
    %v52 = vsub.f32 %v43, %v50
    %vm53 = vcmp.eq.s32.totalorder %v23, 0
    %v54 = vsel %vm53, 1, 0
    %v55 = vcvt.s32.f32 %v54
    %57 = vset.pattern.permute.xlu0 1
    %58 = vperm.xlu0 %57, %v52
    %v59 = vpop.permute.xlu0 %58
    %v61 = vmul.f32 %v59, %v55
    %62 = vrot.lane.b32.xlu0 %v38, 2
    %v63 = vpop.permute.xlu0 %62
    %v65 = vmul.f32 %v26, %v63
    %66 = vrot.lane.b32.xlu0 %v38, 126
    %v67 = vpop.permute.xlu0 %66
    %v69 = vmul.f32 %v26, %v67
    %71 = vrot.lane.b32.xlu0 %v69, 2
    %v72 = vpop.permute.xlu0 %71
    %v74 = vsub.f32 %v65, %v72
    %76 = vset.pattern.permute.xlu0 2
    %77 = vperm.xlu0 %76, %v74
    %v78 = vpop.permute.xlu0 %77
    %v80 = vmul.f32 %v78, %v26
    %v81 = vadd.f32 %v61, %v80
    %vm82 = vcmp.eq.s32.totalorder %v23, 2
    %v83 = vsel %vm82, 1, 0
    %v84 = vcvt.s32.f32 %v83
    %85 = vset.pattern.permute.xlu0 0
    %86 = vperm.xlu0 %85, %v52
    %v87 = vpop.permute.xlu0 %86
    %v89 = vmul.f32 %v87, %v84
    %v90 = vadd.f32 %v81, %v89
    %v91 = vmul.f32 %v90, %v90
    %v92 = vsel %vm32, %v91, 0.0
    %93 = vadd.xlane.f32.xlu0 %v92
    %v94 = vpop.xlane.xlu0 %93
    %v95 = vmax.f32 %v94, 1e-10
    %v96 = vrsqrt.pop %v95
    %v97 = vmul.f32 %v90, %v96
    %99 = vrot.lane.b32.xlu0 %v97, 127
    %v100 = vpop.permute.xlu0 %99
    %v102 = vmul.f32 %v38, %v100
    %103 = vrot.lane.b32.xlu0 %v97, 1
    %v104 = vpop.permute.xlu0 %103
    %v106 = vmul.f32 %v38, %v104
    %108 = vrot.lane.b32.xlu0 %v106, 127
    %v109 = vpop.permute.xlu0 %108
    %v111 = vsub.f32 %v102, %v109
    %113 = vset.pattern.permute.xlu0 1
    %114 = vperm.xlu0 %113, %v111
    %v115 = vpop.permute.xlu0 %114
    %v117 = vmul.f32 %v115, %v55
    %118 = vrot.lane.b32.xlu0 %v97, 2
    %v119 = vpop.permute.xlu0 %118
    %v121 = vmul.f32 %v38, %v119
    %122 = vrot.lane.b32.xlu0 %v97, 126
    %v123 = vpop.permute.xlu0 %122
    %v125 = vmul.f32 %v38, %v123
    %127 = vrot.lane.b32.xlu0 %v125, 2
    %v128 = vpop.permute.xlu0 %127
    %v130 = vsub.f32 %v121, %v128
    %132 = vset.pattern.permute.xlu0 2
    %133 = vperm.xlu0 %132, %v130
    %v134 = vpop.permute.xlu0 %133
    %v136 = vmul.f32 %v134, %v26
    %v137 = vadd.f32 %v117, %v136
    %138 = vset.pattern.permute.xlu0 0
    %139 = vperm.xlu0 %138, %v111
    %v140 = vpop.permute.xlu0 %139
    %v142 = vmul.f32 %v140, %v84
    %v143 = vadd.f32 %v137, %v142
    %v144 = vmul.f32 %v143, %v143
    %v145 = vsel %vm32, %v144, 0.0
    %146 = vadd.xlane.f32.xlu0 %v145
    %v147 = vpop.xlane.xlu0 %146
    %v148 = vmax.f32 %v147, 1e-10
    %v149 = vrsqrt.pop %v148
    %v150 = vmul.f32 %v143, %v149
    %v151 = vand.u32 2147483647, %v97
    %vm152 = vcmp.le.f32.partialorder %v151, 0.005
    %v153 = vsel %vm152, 1.0, 0.0
    %v154 = vmul.f32 %v153, %v29
    %v155 = vsel %vm32, %v154, 0.0
    %156 = vadd.xlane.f32.xlu0 %v155
    %v157 = vpop.xlane.xlu0 %156
    %vm158 = vcmp.gt.f32.partialorder %v157, 2.5
    %v159 = vmul.f32 %v150, %v41
    %v160 = vmul.f32 %v150, %v45
    %162 = vrot.lane.b32.xlu0 %v160, 127
    %v163 = vpop.permute.xlu0 %162
    %v165 = vsub.f32 %v159, %v163
    %167 = vset.pattern.permute.xlu0 1
    %168 = vperm.xlu0 %167, %v165
    %v169 = vpop.permute.xlu0 %168
    %v171 = vmul.f32 %v169, %v55
    %v172 = vmul.f32 %v150, %v63
    %v173 = vmul.f32 %v150, %v67
    %175 = vrot.lane.b32.xlu0 %v173, 2
    %v176 = vpop.permute.xlu0 %175
    %v178 = vsub.f32 %v172, %v176
    %180 = vset.pattern.permute.xlu0 2
    %181 = vperm.xlu0 %180, %v178
    %v182 = vpop.permute.xlu0 %181
    %v184 = vmul.f32 %v182, %v26
    %v185 = vadd.f32 %v171, %v184
    %186 = vset.pattern.permute.xlu0 0
    %187 = vperm.xlu0 %186, %v165
    %v188 = vpop.permute.xlu0 %187
    %v190 = vmul.f32 %v188, %v84
    %v191 = vadd.f32 %v185, %v190
    %v192 = vmul.f32 %v191, %v191
    %v193 = vsel %vm32, %v192, 0.0
    %194 = vadd.xlane.f32.xlu0 %v193
    %v195 = vpop.xlane.xlu0 %194
    %v196 = vmax.f32 %v195, 1e-10
    %v197 = vrsqrt.pop %v196
    %v198 = vmul.f32 %v191, %v197
    %v199 = vsel %vm158, 1, 0
    %vm200 = vcmp.eq.s32.totalorder %v199, 1
    %v201 = vsel %vm200, %v198, %v97
    %203 = vset.pattern.permute.xlu0 0
    %204 = vperm.xlu0 %203, %v21
    %v205 = vpop.permute.xlu0 %204
    %v207 = vrot.slane %v21, 3
    %v209 = vmul.f32 %v205, %v207
    %210 = vset.pattern.permute.xlu0 1
    %211 = vperm.xlu0 %210, %v21
    %v212 = vpop.permute.xlu0 %211
    %v214 = vrot.slane %v21, 4
    %v216 = vmul.f32 %v212, %v214
    %v217 = vadd.f32 %v209, %v216
    %218 = vset.pattern.permute.xlu0 2
    %219 = vperm.xlu0 %218, %v21
    %v220 = vpop.permute.xlu0 %219
    %v222 = vrot.slane %v21, 5
    %v224 = vmul.f32 %v220, %v222
    %v225 = vadd.f32 %v217, %v224
    %v226 = vrot.slane %v21, 1
    %v228 = vadd.f32 %v225, %v226
    %v229 = vmax.f32 %v228, 0.0
    %v230 = vrot.slane %v21, 6
    %v232 = vmul.f32 %v229, %v230
    %vm233 = vcmask 1041409
    %v234 = vsel %vm233, %v232, 0.0
    %235 = vadd.xlane.f32.xlu0 %v234
    %v236 = vpop.xlane.xlu0 %235
    %v237 = vrot.slane %v21, 2
    %v239 = vadd.f32 %v236, %v237
    %v240 = vsub.f32 %v239, 1.0
    %v241 = vmul.f32 %v240, %v240
    %243 = vset.pattern.permute.xlu0 0
    %244 = vperm.xlu0 %243, %v201
    %v245 = vpop.permute.xlu0 %244
    %v247 = vmul.f32 %v245, %v84
    %vm248 = vcmp.eq.s32.totalorder %v23, 3
    %v249 = vsel %vm248, 1, 0
    %v250 = vcvt.s32.f32 %v249
    %251 = vset.pattern.permute.xlu0 1
    %252 = vperm.xlu0 %251, %v201
    %v253 = vpop.permute.xlu0 %252
    %v255 = vmul.f32 %v253, %v250
    %v256 = vadd.f32 %v247, %v255
    %vm257 = vcmp.eq.s32.totalorder %v23, 4
    %v258 = vsel %vm257, 1, 0
    %v259 = vcvt.s32.f32 %v258
    %260 = vset.pattern.permute.xlu0 2
    %261 = vperm.xlu0 %260, %v201
    %v262 = vpop.permute.xlu0 %261
    %v264 = vmul.f32 %v262, %v259
    %v265 = vadd.f32 %v256, %v264
    %v266 = vmul.f32 %v201, %v21
    %v267 = vsel %vm32, %v266, 0.0
    %268 = vadd.xlane.f32.xlu0 %v267
    %v269 = vpop.xlane.xlu0 %268
    %v270 = vsub.f32 0.0, %v269
    %vm271 = vcmp.eq.s32.totalorder %v23, 5
    %v272 = vsel %vm271, 1, 0
    %v273 = vcvt.s32.f32 %v272
    %v274 = vmul.f32 %v270, %v273
    %v275 = vadd.f32 %v265, %v274
    %vm276 = vcmp.eq.s32.totalorder %v23, 6
    %v277 = vsel %vm276, 1, 0
    %v278 = vcvt.s32.f32 %v277
    %280 = vset.pattern.permute.xlu0 0
    %281 = vperm.xlu0 %280, %v150
    %v282 = vpop.permute.xlu0 %281
    %v284 = vmul.f32 %v282, %v278
    %v285 = vadd.f32 %v275, %v284
    %vm286 = vcmp.eq.s32.totalorder %v23, 7
    %v287 = vsel %vm286, 1, 0
    %v288 = vcvt.s32.f32 %v287
    %289 = vset.pattern.permute.xlu0 1
    %290 = vperm.xlu0 %289, %v150
    %v291 = vpop.permute.xlu0 %290
    %v293 = vmul.f32 %v291, %v288
    %v294 = vadd.f32 %v285, %v293
    %vm295 = vcmp.eq.s32.totalorder %v23, 8
    %v296 = vsel %vm295, 1, 0
    %v297 = vcvt.s32.f32 %v296
    %298 = vset.pattern.permute.xlu0 2
    %299 = vperm.xlu0 %298, %v150
    %v300 = vpop.permute.xlu0 %299
    %v302 = vmul.f32 %v300, %v297
    %v303 = vadd.f32 %v294, %v302
    %v304 = vmul.f32 %v150, %v21
    %v305 = vsel %vm32, %v304, 0.0
    %306 = vadd.xlane.f32.xlu0 %v305
    %v307 = vpop.xlane.xlu0 %306
    %v308 = vsub.f32 0.0, %v307
    %vm309 = vcmp.eq.s32.totalorder %v23, 9
    %v310 = vsel %vm309, 1, 0
    %v311 = vcvt.s32.f32 %v310
    %v312 = vmul.f32 %v308, %v311
    %v313 = vadd.f32 %v303, %v312
    %vm314 = vcmp.eq.s32.totalorder %v23, 10
    %v315 = vsel %vm314, 1, 0
    %v316 = vcvt.s32.f32 %v315
    %317 = vset.pattern.permute.xlu0 0
    %318 = vperm.xlu0 %317, %v38
    %v319 = vpop.permute.xlu0 %318
    %v321 = vmul.f32 %v319, %v316
    %v322 = vadd.f32 %v313, %v321
    %vm323 = vcmp.eq.s32.totalorder %v23, 11
    %v324 = vsel %vm323, 1, 0
    %v325 = vcvt.s32.f32 %v324
    %326 = vset.pattern.permute.xlu0 1
    %327 = vperm.xlu0 %326, %v38
    %v328 = vpop.permute.xlu0 %327
    %v330 = vmul.f32 %v328, %v325
    %v331 = vadd.f32 %v322, %v330
    %vm332 = vcmp.eq.s32.totalorder %v23, 12
    %v333 = vsel %vm332, 1, 0
    %v334 = vcvt.s32.f32 %v333
    %335 = vset.pattern.permute.xlu0 2
    %336 = vperm.xlu0 %335, %v38
    %v337 = vpop.permute.xlu0 %336
    %v339 = vmul.f32 %v337, %v334
    %v340 = vadd.f32 %v331, %v339
    %v341 = vmul.f32 %v38, %v21
    %v342 = vsel %vm32, %v341, 0.0
    %343 = vadd.xlane.f32.xlu0 %v342
    %v344 = vpop.xlane.xlu0 %343
    %v345 = vsub.f32 0.0, %v344
    %vm346 = vcmp.eq.s32.totalorder %v23, 13
    %v347 = vsel %vm346, 1, 0
    %v348 = vcvt.s32.f32 %v347
    %v349 = vmul.f32 %v345, %v348
    %v350 = vadd.f32 %v340, %v349
    %vm351 = vcmp.eq.s32.totalorder %v23, 17
    %v352 = vsel %vm351, 1, 0
    %v353 = vcvt.s32.f32 %v352
    %v354 = vadd.f32 %v350, %v353
    %356 = vset.pattern.permute.xlu0 0
    %357 = vperm.xlu0 %356, %v239
    %v358 = vpop.permute.xlu0 %357
    %v360 = vmul.f32 %v358, %v55
    %362 = vset.pattern.permute.xlu0 0
    %363 = vperm.xlu0 %362, %v241
    %v364 = vpop.permute.xlu0 %363
    %v366 = vmul.f32 %v364, %v26
    %v367 = vadd.f32 %v360, %v366
    %v369 = vrot.slane %v354, 7
    %v371 = vadd.f32 %v367, %v369
    %372 = vst [vmem:[#allocation5 - $0x1] sm:$0x2] %v371
    // Predicated region
    $region10: #{tpu_custom_call.1} parent=1 // pred_check
      _
    $region11: #{tpu_custom_call.1} parent=1 // pred_check_branch
      %374 = sbr.rel (0) target = $region13
    $region12: #{tpu_custom_call.1} parent=1 // pred_region
      %s376 = ssub.s32 16, 16
      %377 = vsyncadd [#allocation4], %s376
      %s379 = sshll.u32 [#allocation5], 4
      %s380 = int_to_ptr.vmem [resolvable:$true] %s379
      %382 = dma.vmem_to_hbm [thread:$0]  %s380, 16, %s1, [#allocation4]
    $region13: #{tpu_custom_call.1} parent=1 // pred_fallthru
      _
    // Predicated region
    $region14: #{tpu_custom_call.1} parent=1 // pred_check
      _
    $region15: #{tpu_custom_call.1} parent=1 // pred_check_branch
      %384 = sbr.rel (0) target = $region17
    $region16: #{tpu_custom_call.1} parent=1 // pred_region
      %385 = dma.done [#allocation4], 16
    $region17: #{tpu_custom_call.1} parent=1 // pred_fallthru
      _
    %386 = vsyncpa [#allocation3], 1
    %387 = vsyncpa [#allocation4], 1

</llo_original>
